<compile_context>
chip_gen: v7x
topology: tpu7x:2x2x1
jax: 0.10.0
libtpu: 0.0.40
codegen_flags: <defaults>
</compile_context>

<pallas_src>
import jax
import jax.numpy as jnp
import numpy as np
from jax.experimental import pallas as pl
from jax.experimental.pallas import tpu as pltpu


def _generator_kernel(z_ref, x_ref, w1z_ref, w1x_ref, b1_ref, w2_ref, b2_ref, o_ref):
    # First Linear on concat([z, x]), expressed as two dots on pre-split weights
    # (no cross-lane concat / relayout inside the kernel).  bf16 operands, f32 accumulate.
    h = jnp.dot(z_ref[...], w1z_ref[...], preferred_element_type=jnp.float32)
    h = h + jnp.dot(x_ref[...], w1x_ref[...], preferred_element_type=jnp.float32)
    h = jnp.maximum(h + b1_ref[...], 0.0)                       # bias + ReLU in f32 on the VPU
    # Second Linear: cast the activation back to the weight dtype for the MXU, accumulate f32.
    out = jnp.dot(h.astype(w2_ref.dtype), w2_ref[...],
                  preferred_element_type=jnp.float32) + b2_ref[...]
    o_ref[...] = out.astype(o_ref.dtype)


def prepare_generator_params(w1, b1, w2, b2, z_dim, param_dtype=jnp.bfloat16):
    """One-time parameter prep (hoisted out of the per-call forward).

    Splits w1 into its z / x halves (so the kernel never concatenates along the lane axis)
    and casts the matmul operands to bf16; biases stay f32.
    """
    w1z = jnp.asarray(w1[:z_dim, :], dtype=param_dtype)
    w1x = jnp.asarray(w1[z_dim:, :], dtype=param_dtype)
    b1p = jnp.asarray(b1, dtype=jnp.float32).reshape(1, -1)
    w2p = jnp.asarray(w2, dtype=param_dtype)
    b2p = jnp.asarray(b2, dtype=jnp.float32).reshape(1, -1)
    return w1z, w1x, b1p, w2p, b2p


def generator_forward(z, x, params, *, block_b=256, compute_dtype=jnp.bfloat16):
    """Generator forward pass as a single batch-tiled Pallas kernel.

    z:      [B, z_dim] float32 (cast to bf16 at the kernel boundary)
    x:      [B, x_dim] float32
    params: output of prepare_generator_params -> (w1z, w1x, b1, w2, b2)
    returns: [B, theta_dim] float32
    """
    w1z, w1x, b1, w2, b2 = params
    B, z_dim = z.shape
    x_dim = x.shape[1]
    hidden = w1z.shape[1]
    theta_dim = w2.shape[1]

    # Batch tile: multiple of 16 (bf16 sublane packing).  No batch padding: Pallas masks the
    # ragged last tile itself (rows are independent, so garbage rows read in the last partial
    # input tile are harmless and never written to the output).
    tb = int(min(block_b, max(16, pl.cdiv(B, 16) * 16)))
    grid = (pl.cdiv(B, tb),)

    z = z.astype(compute_dtype)
    x = x.astype(compute_dtype)

    out = pl.pallas_call(
        _generator_kernel,
        out_shape=jax.ShapeDtypeStruct((B, theta_dim), jnp.float32),
        grid=grid,
        in_specs=[
            # activations: tiled over the batch axis
            pl.BlockSpec((tb, z_dim), lambda i: (i, 0)),
            pl.BlockSpec((tb, x_dim), lambda i: (i, 0)),
            # weights / biases: same block every step -> VMEM-resident across the grid
            pl.BlockSpec((z_dim, hidden), lambda i: (0, 0)),
            pl.BlockSpec((x_dim, hidden), lambda i: (0, 0)),
            pl.BlockSpec((1, hidden), lambda i: (0, 0)),
            pl.BlockSpec((hidden, theta_dim), lambda i: (0, 0)),
            pl.BlockSpec((1, theta_dim), lambda i: (0, 0)),
        ],
        # Output last dim == full theta_dim (no lane padding): masked vst, but 16x less HBM
        # write traffic than a 128-padded store at theta_dim=8.
        out_specs=pl.BlockSpec((tb, theta_dim), lambda i: (i, 0)),
        compiler_params=pltpu.CompilerParams(
            dimension_semantics=("parallel",),   # batch axis shards across TCs on v7x
        ),
    )(z, x, w1z, w1x, b1, w2, b2)
    return out


def init_generator_params(key, z_dim, x_dim, theta_dim, hidden=128):
    """Deterministic init mimicking torch.nn.Linear default (U[-1/sqrt(fan_in), 1/sqrt(fan_in)])."""
    k1, k2, k3, k4 = jax.random.split(key, 4)
    in_dim = z_dim + x_dim
    bound1 = 1.0 / np.sqrt(in_dim)
    bound2 = 1.0 / np.sqrt(hidden)
    w1 = jax.random.uniform(k1, (in_dim, hidden), jnp.float32, -bound1, bound1)
    b1 = jax.random.uniform(k2, (1, hidden), jnp.float32, -bound1, bound1)
    w2 = jax.random.uniform(k3, (hidden, theta_dim), jnp.float32, -bound2, bound2)
    b2 = jax.random.uniform(k4, (1, theta_dim), jnp.float32, -bound2, bound2)
    return w1, b1, w2, b2


if __name__ == "__main__":
    # Small shapes consistent with the module's forward.  B is deliberately not a multiple of
    # the tile size and larger than one tile so the ragged last batch tile is exercised.
    B, z_dim, x_dim, theta_dim = 200, 16, 16, 8
    TB = 128  # cdiv(200, 128) = 2 grid steps (both TCs busy on v7x)

    key = jax.random.PRNGKey(0)
    kz, kx, kp = jax.random.split(key, 3)
    z = jax.random.normal(kz, (B, z_dim), jnp.float32)
    x = jax.random.normal(kx, (B, x_dim), jnp.float32)
    w1, b1, w2, b2 = init_generator_params(kp, z_dim, x_dim, theta_dim)

    # One-time weight prep (split + bf16 cast), hoisted out of the per-call forward.
    params = prepare_generator_params(w1, b1, w2, b2, z_dim)

    out = generator_forward(z, x, params, block_b=TB)
    out = jax.block_until_ready(out)

    # Pure-JAX f32 reference; tolerance accounts for bf16 operands with f32 accumulation.
    zx = jnp.concatenate([z, x], axis=1)
    ref = jnp.maximum(zx @ w1 + b1, 0.0) @ w2 + b2
    np.testing.assert_allclose(np.asarray(out), np.asarray(ref), rtol=5e-2, atol=3e-2)

    assert out.shape == (B, theta_dim)
    print("KERNEL_OK")
</pallas_src>

<mosaic_0001>
module attributes {stable_mosaic.version = 11 : i64} {
  func.func @_generator_kernel(%arg0: i32, %arg1: memref<128x16xbf16, #tpu.memory_space<vmem>>, %arg2: memref<128x16xbf16, #tpu.memory_space<vmem>>, %arg3: memref<16x128xbf16, #tpu.memory_space<vmem>>, %arg4: memref<16x128xbf16, #tpu.memory_space<vmem>>, %arg5: memref<1x128xf32, #tpu.memory_space<vmem>>, %arg6: memref<128x8xbf16, #tpu.memory_space<vmem>>, %arg7: memref<1x8xf32, #tpu.memory_space<vmem>>, %arg8: memref<128x8xf32, #tpu.memory_space<vmem>>) attributes {dimension_semantics = [#tpu.dimension_semantics<parallel>], iteration_bounds = array<i64: 2>, scalar_prefetch = 0 : i64, scratch_operands = 0 : i64, tpu.core_type = #tpu.core_type<tc>, window_params = [{transform_indices = @transform_0, window_bounds = array<i64: 128, 16>}, {transform_indices = @transform_1, window_bounds = array<i64: 128, 16>}, {pipeline_mode = #tpu.pipeline_mode<synchronous>, transform_indices = @transform_2, window_bounds = array<i64: 16, 128>}, {pipeline_mode = #tpu.pipeline_mode<synchronous>, transform_indices = @transform_3, window_bounds = array<i64: 16, 128>}, {pipeline_mode = #tpu.pipeline_mode<synchronous>, transform_indices = @transform_4, window_bounds = array<i64: 1, 128>}, {pipeline_mode = #tpu.pipeline_mode<synchronous>, transform_indices = @transform_5, window_bounds = array<i64: 128, 8>}, {pipeline_mode = #tpu.pipeline_mode<synchronous>, transform_indices = @transform_6, window_bounds = array<i64: 1, 8>}, {transform_indices = @transform_7, window_bounds = array<i64: 128, 8>}]} {
    %c0 = arith.constant 0 : index
    %c0_0 = arith.constant 0 : index
    %0 = vector.load %arg1[%c0, %c0_0] : memref<128x16xbf16, #tpu.memory_space<vmem>>, vector<128x16xbf16>
    %c0_1 = arith.constant 0 : index
    %c0_2 = arith.constant 0 : index
    %1 = vector.load %arg3[%c0_1, %c0_2] : memref<16x128xbf16, #tpu.memory_space<vmem>>, vector<16x128xbf16>
    %cst = arith.constant dense<0.000000e+00> : vector<128x128xf32>
    %2 = tpu.matmul %0, %1, %cst {dimension_numbers = #tpu.dot_dimension_numbers<[1], [0], [0], [1], [0, 0, 1, 1], [], []>} : vector<128x16xbf16>, vector<16x128xbf16>, vector<128x128xf32> -> vector<128x128xf32>
    %c0_3 = arith.constant 0 : index
    %c0_4 = arith.constant 0 : index
    %3 = vector.load %arg2[%c0_3, %c0_4] : memref<128x16xbf16, #tpu.memory_space<vmem>>, vector<128x16xbf16>
    %c0_5 = arith.constant 0 : index
    %c0_6 = arith.constant 0 : index
    %4 = vector.load %arg4[%c0_5, %c0_6] : memref<16x128xbf16, #tpu.memory_space<vmem>>, vector<16x128xbf16>
    %cst_7 = arith.constant dense<0.000000e+00> : vector<128x128xf32>
    %5 = tpu.matmul %3, %4, %cst_7 {dimension_numbers = #tpu.dot_dimension_numbers<[1], [0], [0], [1], [0, 0, 1, 1], [], []>} : vector<128x16xbf16>, vector<16x128xbf16>, vector<128x128xf32> -> vector<128x128xf32>
    %6 = arith.addf %2, %5 : vector<128x128xf32>
    %c0_8 = arith.constant 0 : index
    %c0_9 = arith.constant 0 : index
    %7 = vector.load %arg5[%c0_8, %c0_9] : memref<1x128xf32, #tpu.memory_space<vmem>>, vector<1x128xf32>
    %8 = vector.broadcast %7 : vector<1x128xf32> to vector<128x128xf32>
    %9 = arith.addf %6, %8 : vector<128x128xf32>
    %cst_10 = arith.constant 0.000000e+00 : f32
    %10 = vector.broadcast %cst_10 : f32 to vector<128x128xf32>
    %11 = arith.maximumf %9, %10 : vector<128x128xf32>
    %12 = arith.truncf %11 : vector<128x128xf32> to vector<128x128xbf16>
    %c0_11 = arith.constant 0 : index
    %c0_12 = arith.constant 0 : index
    %13 = vector.load %arg6[%c0_11, %c0_12] : memref<128x8xbf16, #tpu.memory_space<vmem>>, vector<128x8xbf16>
    %cst_13 = arith.constant dense<0.000000e+00> : vector<128x8xf32>
    %14 = tpu.matmul %12, %13, %cst_13 {dimension_numbers = #tpu.dot_dimension_numbers<[1], [0], [0], [1], [0, 0, 1, 1], [], []>} : vector<128x128xbf16>, vector<128x8xbf16>, vector<128x8xf32> -> vector<128x8xf32>
    %c0_14 = arith.constant 0 : index
    %c0_15 = arith.constant 0 : index
    %15 = vector.load %arg7[%c0_14, %c0_15] : memref<1x8xf32, #tpu.memory_space<vmem>>, vector<1x8xf32>
    %16 = vector.broadcast %15 : vector<1x8xf32> to vector<128x8xf32>
    %17 = arith.addf %14, %16 : vector<128x8xf32>
    %c0_16 = arith.constant 0 : index
    %c0_17 = arith.constant 0 : index
    %18 = vector.load %arg8[%c0_16, %c0_17] : memref<128x8xf32, #tpu.memory_space<vmem>>, vector<128x8xf32>
    tpu.vector_store %arg8[%c0_16, %c0_17], %17 {strides = array<i32>} : memref<128x8xf32, #tpu.memory_space<vmem>>, vector<128x8xf32>,
    return
  }
  func.func @transform_0(%arg0: i32) -> (i32, i32) {
    %c0_i32 = arith.constant 0 : i32
    %c0_i32_0 = arith.constant 0 : i32
    return %arg0, %c0_i32 : i32, i32
  }
  func.func @transform_1(%arg0: i32) -> (i32, i32) {
    %c0_i32 = arith.constant 0 : i32
    %c0_i32_0 = arith.constant 0 : i32
    return %arg0, %c0_i32 : i32, i32
  }
  func.func @transform_2(%arg0: i32) -> (i32, i32) {
    %c0_i32 = arith.constant 0 : i32
    %c0_i32_0 = arith.constant 0 : i32
    %c0_i32_1 = arith.constant 0 : i32
    return %c0_i32, %c0_i32_0 : i32, i32
  }
  func.func @transform_3(%arg0: i32) -> (i32, i32) {
    %c0_i32 = arith.constant 0 : i32
    %c0_i32_0 = arith.constant 0 : i32
    %c0_i32_1 = arith.constant 0 : i32
    return %c0_i32, %c0_i32_0 : i32, i32
  }
  func.func @transform_4(%arg0: i32) -> (i32, i32) {
    %c0_i32 = arith.constant 0 : i32
    %c0_i32_0 = arith.constant 0 : i32
    %c0_i32_1 = arith.constant 0 : i32
    return %c0_i32, %c0_i32_0 : i32, i32
  }
  func.func @transform_5(%arg0: i32) -> (i32, i32) {
    %c0_i32 = arith.constant 0 : i32
    %c0_i32_0 = arith.constant 0 : i32
    %c0_i32_1 = arith.constant 0 : i32
    return %c0_i32, %c0_i32_0 : i32, i32
  }
  func.func @transform_6(%arg0: i32) -> (i32, i32) {
    %c0_i32 = arith.constant 0 : i32
    %c0_i32_0 = arith.constant 0 : i32
    %c0_i32_1 = arith.constant 0 : i32
    return %c0_i32, %c0_i32_0 : i32, i32
  }
  func.func @transform_7(%arg0: i32) -> (i32, i32) {
    %c0_i32 = arith.constant 0 : i32
    %c0_i32_0 = arith.constant 0 : i32
    return %arg0, %c0_i32 : i32, i32
  }
}

</mosaic_0001>

<llo_original>
// kernel: tpu_custom_call.1
$region0: #{tpu_custom_call.1}
  #allocation0 [shape = 'u32[]', space=smem, size = 0x4, offset = 0x4, fixed_abs, tag = 'smem constant byte address 0x4 - core index']
  #allocation1 [shape = 'u32[144,128]{1,0:T(1,128)}', space=vmem, size = 0x12000, scoped, tag = 'internal scratch']
  %s0 = inlined_call_operand.vmem [shape: bf16[200,16], index: 0, kind: input, shape index: {}]
  %s1 = inlined_call_operand.vmem [shape: bf16[200,16], index: 1, kind: input, shape index: {}]
  %s2 = inlined_call_operand.vmem [shape: bf16[16,128], index: 2, kind: input, shape index: {}]
  %s3 = inlined_call_operand.vmem [shape: bf16[16,128], index: 3, kind: input, shape index: {}]
  %s4 = inlined_call_operand.vmem [shape: f32[1,128], index: 4, kind: input, shape index: {}]
  %s5 = inlined_call_operand.vmem [shape: bf16[128,8], index: 5, kind: input, shape index: {}]
  %s6 = inlined_call_operand.vmem [shape: f32[1,8], index: 6, kind: input, shape index: {}]
  %s7 = inlined_call_operand.vmem [shape: f32[200,8], index: 7, kind: output, shape index: {}]
  %s8 = sld [smem:[#allocation0]]
  $region109: #{tpu_custom_call.1} parent=0
    _
  %s10 = ssub.s32 1, %s8
  %s11 = scalar_select 0, %s10, %s8
  $region1: #{tpu_custom_call.1} parent=0
    #allocation2 [shape = 'u8[131072]{0}', space=vmem, size = 0x20000, scoped, tag = 'output window, operand 0']
    loop: start=0, step=1, limit=4
    $region2: #{tpu_custom_call.1} parent=1 // loop_pre_header
      _
    $region3: #{tpu_custom_call.1} parent=1 // loop_header
      %s13 = sphi 0, %s17
      %p14 = scmp.ge.s32.totalorder %s13, 4
      %s23 = sphi 0, %s25
      %s26 = sphi 0, %s23
      %s27 = sphi 0, %s26
      %s43 = sphi 0, %s27
      %s49 = sphi 0, %s51
      %s52 = sphi 0, %s49
      %s53 = sphi 0, %s52
      %s69 = sphi 0, %s53
      %s73 = sphi 0, %s73
      %s75 = sphi 0, %s73
      %s76 = sphi 0, %s75
      %s90 = sphi 0, %s76
      %s94 = sphi 0, %s94
      %s96 = sphi 0, %s94
      %s97 = sphi 0, %s96
      %s111 = sphi 0, %s97
      %s115 = sphi 0, %s115
      %s117 = sphi 0, %s115
      %s118 = sphi 0, %s117
      %s132 = sphi 0, %s118
      %s136 = sphi 0, %s136
      %s138 = sphi 0, %s136
      %s139 = sphi 0, %s138
      %s153 = sphi 0, %s139
      %s157 = sphi 0, %s157
      %s159 = sphi 0, %s157
      %s160 = sphi 0, %s159
      %s174 = sphi 0, %s160
      %s180 = sphi 0, %s182
      %s183 = sphi 0, %s180
      %s184 = sphi 0, %s183
      %s200 = sphi 0, %s184
    $region4: #{tpu_custom_call.1} parent=1 // loop_header_branch
      %16 = sbr.rel (%p14) target = $region8
    $region5: #{tpu_custom_call.1} parent=1 // loop_body
      %s18 = ssub.s32 %s13, 1
      %s19 = ssub.s32 %s13, 2
      %s20 = sadd.s32 %s13, 1
      %s21 = ssub.s32 %s13, %s20
      %p22 = scmp.eq.s32.totalorder %s21, 0
      %s24 = sadd.s32 %s23, 1
      %s25 = scalar_select %p22, %s23, %s24
      %p28 = pneg %p22
      %p29 = scmp.eq.s32.totalorder %s13, 1
      %p30 = por %p28, %p29
      %p31 = scmp.ne.s32.totalorder %s23, %s26
      %p32 = scmp.eq.s32.totalorder %s13, 0
      %p33 = por %p31, %p32
      %p34 = scmp.ne.s32.totalorder %s23, %s26
      %p35 = scmp.eq.s32.totalorder %s18, 1
      %p36 = por %p34, %p35
      %p37 = scmp.ne.s32.totalorder %s26, %s27
      %p38 = scmp.eq.s32.totalorder %s18, 0
      %p39 = por %p37, %p38
      %p40 = scmp.ne.s32.totalorder %s26, %s27
      %p41 = scmp.eq.s32.totalorder %s19, 1
      %p42 = por %p40, %p41
      %p44 = scmp.ne.s32.totalorder %s27, %s43
      %p45 = scmp.eq.s32.totalorder %s19, 0
      %p46 = por %p44, %p45
      %s47 = ssub.s32 %s13, %s20
      %p48 = scmp.eq.s32.totalorder %s47, 0
      %s50 = sadd.s32 %s49, 1
      %s51 = scalar_select %p48, %s49, %s50
      %p54 = pneg %p48
      %p55 = scmp.eq.s32.totalorder %s13, 1
      %p56 = por %p54, %p55
      %p57 = scmp.ne.s32.totalorder %s49, %s52
      %p58 = scmp.eq.s32.totalorder %s13, 0
      %p59 = por %p57, %p58
      %p60 = scmp.ne.s32.totalorder %s49, %s52
      %p61 = scmp.eq.s32.totalorder %s18, 1
      %p62 = por %p60, %p61
      %p63 = scmp.ne.s32.totalorder %s52, %s53
      %p64 = scmp.eq.s32.totalorder %s18, 0
      %p65 = por %p63, %p64
      %p66 = scmp.ne.s32.totalorder %s52, %s53
      %p67 = scmp.eq.s32.totalorder %s19, 1
      %p68 = por %p66, %p67
      %p70 = scmp.ne.s32.totalorder %s53, %s69
      %p71 = scmp.eq.s32.totalorder %s19, 0
      %p72 = por %p70, %p71
      %s74 = sadd.s32 %s73, 1
      %p77 = scmp.eq.s32.totalorder %s13, 1
      %p78 = scmp.ne.s32.totalorder %s73, %s75
      %p79 = scmp.eq.s32.totalorder %s13, 0
      %p80 = por %p78, %p79
      %p81 = scmp.ne.s32.totalorder %s73, %s75
      %p82 = scmp.eq.s32.totalorder %s18, 1
      %p83 = por %p81, %p82
      %p84 = scmp.ne.s32.totalorder %s75, %s76
      %p85 = scmp.eq.s32.totalorder %s18, 0
      %p86 = por %p84, %p85
      %p87 = scmp.ne.s32.totalorder %s75, %s76
      %p88 = scmp.eq.s32.totalorder %s19, 1
      %p89 = por %p87, %p88
      %p91 = scmp.ne.s32.totalorder %s76, %s90
      %p92 = scmp.eq.s32.totalorder %s19, 0
      %p93 = por %p91, %p92
      %s95 = sadd.s32 %s94, 1
      %p98 = scmp.eq.s32.totalorder %s13, 1
      %p99 = scmp.ne.s32.totalorder %s94, %s96
      %p100 = scmp.eq.s32.totalorder %s13, 0
      %p101 = por %p99, %p100
      %p102 = scmp.ne.s32.totalorder %s94, %s96
      %p103 = scmp.eq.s32.totalorder %s18, 1
      %p104 = por %p102, %p103
      %p105 = scmp.ne.s32.totalorder %s96, %s97
      %p106 = scmp.eq.s32.totalorder %s18, 0
      %p107 = por %p105, %p106
      %p108 = scmp.ne.s32.totalorder %s96, %s97
      %p109 = scmp.eq.s32.totalorder %s19, 1
      %p110 = por %p108, %p109
      %p112 = scmp.ne.s32.totalorder %s97, %s111
      %p113 = scmp.eq.s32.totalorder %s19, 0
      %p114 = por %p112, %p113
      %s116 = sadd.s32 %s115, 1
      %p119 = scmp.eq.s32.totalorder %s13, 1
      %p120 = scmp.ne.s32.totalorder %s115, %s117
      %p121 = scmp.eq.s32.totalorder %s13, 0
      %p122 = por %p120, %p121
      %p123 = scmp.ne.s32.totalorder %s115, %s117
      %p124 = scmp.eq.s32.totalorder %s18, 1
      %p125 = por %p123, %p124
      %p126 = scmp.ne.s32.totalorder %s117, %s118
      %p127 = scmp.eq.s32.totalorder %s18, 0
      %p128 = por %p126, %p127
      %p129 = scmp.ne.s32.totalorder %s117, %s118
      %p130 = scmp.eq.s32.totalorder %s19, 1
      %p131 = por %p129, %p130
      %p133 = scmp.ne.s32.totalorder %s118, %s132
      %p134 = scmp.eq.s32.totalorder %s19, 0
      %p135 = por %p133, %p134
      %s137 = sadd.s32 %s136, 1
      %p140 = scmp.eq.s32.totalorder %s13, 1
      %p141 = scmp.ne.s32.totalorder %s136, %s138
      %p142 = scmp.eq.s32.totalorder %s13, 0
      %p143 = por %p141, %p142
      %p144 = scmp.ne.s32.totalorder %s136, %s138
      %p145 = scmp.eq.s32.totalorder %s18, 1
      %p146 = por %p144, %p145
      %p147 = scmp.ne.s32.totalorder %s138, %s139
      %p148 = scmp.eq.s32.totalorder %s18, 0
      %p149 = por %p147, %p148
      %p150 = scmp.ne.s32.totalorder %s138, %s139
      %p151 = scmp.eq.s32.totalorder %s19, 1
      %p152 = por %p150, %p151
      %p154 = scmp.ne.s32.totalorder %s139, %s153
      %p155 = scmp.eq.s32.totalorder %s19, 0
      %p156 = por %p154, %p155
      %s158 = sadd.s32 %s157, 1
      %p161 = scmp.eq.s32.totalorder %s13, 1
      %p162 = scmp.ne.s32.totalorder %s157, %s159
      %p163 = scmp.eq.s32.totalorder %s13, 0
      %p164 = por %p162, %p163
      %p165 = scmp.ne.s32.totalorder %s157, %s159
      %p166 = scmp.eq.s32.totalorder %s18, 1
      %p167 = por %p165, %p166
      %p168 = scmp.ne.s32.totalorder %s159, %s160
      %p169 = scmp.eq.s32.totalorder %s18, 0
      %p170 = por %p168, %p169
      %p171 = scmp.ne.s32.totalorder %s159, %s160
      %p172 = scmp.eq.s32.totalorder %s19, 1
      %p173 = por %p171, %p172
      %p175 = scmp.ne.s32.totalorder %s160, %s174
      %p176 = scmp.eq.s32.totalorder %s19, 0
      %p177 = por %p175, %p176
      %s178 = ssub.s32 %s13, %s20
      %p179 = scmp.eq.s32.totalorder %s178, 0
      %s181 = sadd.s32 %s180, 1
      %s182 = scalar_select %p179, %s180, %s181
      %p185 = pneg %p179
      %p186 = scmp.eq.s32.totalorder %s13, 1
      %p187 = por %p185, %p186
      %p188 = scmp.ne.s32.totalorder %s180, %s183
      %p189 = scmp.eq.s32.totalorder %s13, 0
      %p190 = por %p188, %p189
      %p191 = scmp.ne.s32.totalorder %s180, %s183
      %p192 = scmp.eq.s32.totalorder %s18, 1
      %p193 = por %p191, %p192
      %p194 = scmp.ne.s32.totalorder %s183, %s184
      %p195 = scmp.eq.s32.totalorder %s18, 0
      %p196 = por %p194, %p195
      %p197 = scmp.ne.s32.totalorder %s183, %s184
      %p198 = scmp.eq.s32.totalorder %s19, 1
      %p199 = por %p197, %p198
      %p201 = scmp.ne.s32.totalorder %s184, %s200
      %p202 = scmp.eq.s32.totalorder %s19, 0
      %p203 = por %p201, %p202
      %p204 = scmp.le.s32.totalorder 1, %s13
      %p205 = scmp.lt.s32.totalorder %s13, 3
      %p206 = pnand %p204, %p205
      %p207 = pneg %p206
      // Predicated region
      $region9: #{tpu_custom_call.1} parent=5 // pred_check
        _
      $region10: #{tpu_custom_call.1} parent=5 // pred_check_branch
        %209 = sbr.rel (%p206) target = $region12
      $region11: #{tpu_custom_call.1} parent=5 // pred_region
        %s210 = ssub.s32 %s13, 1
        // Predicated region
        $region13: #{tpu_custom_call.1} parent=11 // pred_check
          %p211 = pneg %p86
        $region14: #{tpu_custom_call.1} parent=11 // pred_check_branch
          %213 = sbr.rel (%p211) target = $region16
        $region15: #{tpu_custom_call.1} parent=11 // pred_region
          _
        $region16: #{tpu_custom_call.1} parent=11 // pred_fallthru
          _
        // Predicated region
        $region17: #{tpu_custom_call.1} parent=11 // pred_check
          %p214 = pneg %p107
        $region18: #{tpu_custom_call.1} parent=11 // pred_check_branch
          %216 = sbr.rel (%p214) target = $region20
        $region19: #{tpu_custom_call.1} parent=11 // pred_region
          _
        $region20: #{tpu_custom_call.1} parent=11 // pred_fallthru
          _
        // Predicated region
        $region21: #{tpu_custom_call.1} parent=11 // pred_check
          %p217 = pneg %p128
        $region22: #{tpu_custom_call.1} parent=11 // pred_check_branch
          %219 = sbr.rel (%p217) target = $region24
        $region23: #{tpu_custom_call.1} parent=11 // pred_region
          _
        $region24: #{tpu_custom_call.1} parent=11 // pred_fallthru
          _
        // Predicated region
        $region25: #{tpu_custom_call.1} parent=11 // pred_check
          %p220 = pneg %p149
        $region26: #{tpu_custom_call.1} parent=11 // pred_check_branch
          %222 = sbr.rel (%p220) target = $region28
        $region27: #{tpu_custom_call.1} parent=11 // pred_region
          _
        $region28: #{tpu_custom_call.1} parent=11 // pred_fallthru
          _
        // Predicated region
        $region29: #{tpu_custom_call.1} parent=11 // pred_check
          %p223 = pneg %p170
        $region30: #{tpu_custom_call.1} parent=11 // pred_check_branch
          %225 = sbr.rel (%p223) target = $region32
        $region31: #{tpu_custom_call.1} parent=11 // pred_region
          _
        $region32: #{tpu_custom_call.1} parent=11 // pred_fallthru
          _
      $region12: #{tpu_custom_call.1} parent=5 // pred_fallthru
        _
      %p226 = scmp.lt.s32.totalorder %s13, 2
      // Predicated region
      $region33: #{tpu_custom_call.1} parent=5 // pred_check
        %p227 = pneg %p226
      $region34: #{tpu_custom_call.1} parent=5 // pred_check_branch
        %229 = sbr.rel (%p227) target = $region36
      $region35: #{tpu_custom_call.1} parent=5 // pred_region
        // Predicated region
        $region37: #{tpu_custom_call.1} parent=35 // pred_check
          %p230 = pneg %p33
        $region38: #{tpu_custom_call.1} parent=35 // pred_check_branch
          %232 = sbr.rel (%p230) target = $region40
        $region39: #{tpu_custom_call.1} parent=35 // pred_region
          %s233 = smul.u32 16, %s13
          %s234 = ssub.s32 25, %s233
          %p235 = scmp.lt.s32.totalorder %s234, 16
          %s236 = scalar_select %p235, %s234, 16
          %s237 = smul.u32 64, %s236
          %p238 = scmp.lt.s32.totalorder %s233, 24
          %s239 = scalar_select %p238, %s233, 24
          %s240 = smul.addr %s239, 4
          %s241 = scalar_lea.vmem %s0, %s240
          %s242 = smul.u32 16, %s13
          %s243 = ssub.s32 25, %s242
          %p244 = scmp.lt.s32.totalorder %s243, 16
          %s245 = scalar_select %p244, %s243, 16
          %s246 = smul.u32 64, %s245
        $region40: #{tpu_custom_call.1} parent=35 // pred_fallthru
          _
        // Predicated region
        $region41: #{tpu_custom_call.1} parent=35 // pred_check
          %p247 = pneg %p59
        $region42: #{tpu_custom_call.1} parent=35 // pred_check_branch
          %249 = sbr.rel (%p247) target = $region44
        $region43: #{tpu_custom_call.1} parent=35 // pred_region
          %s250 = smul.u32 16, %s13
          %s251 = ssub.s32 25, %s250
          %p252 = scmp.lt.s32.totalorder %s251, 16
          %s253 = scalar_select %p252, %s251, 16
          %s254 = smul.u32 64, %s253
          %p255 = scmp.lt.s32.totalorder %s250, 24
          %s256 = scalar_select %p255, %s250, 24
          %s257 = smul.addr %s256, 4
          %s258 = scalar_lea.vmem %s1, %s257
          %s259 = smul.u32 16, %s13
          %s260 = ssub.s32 25, %s259
          %p261 = scmp.lt.s32.totalorder %s260, 16
          %s262 = scalar_select %p261, %s260, 16
          %s263 = smul.u32 64, %s262
        $region44: #{tpu_custom_call.1} parent=35 // pred_fallthru
          _
      $region36: #{tpu_custom_call.1} parent=5 // pred_fallthru
        _
      %p264 = scmp.le.s32.totalorder 1, %s13
      %p265 = scmp.lt.s32.totalorder %s13, 3
      %p266 = pnand %p264, %p265
      %p267 = pneg %p266
      // Predicated region
      $region45: #{tpu_custom_call.1} parent=5 // pred_check
        _
      $region46: #{tpu_custom_call.1} parent=5 // pred_check_branch
        %269 = sbr.rel (%p266) target = $region48
      $region47: #{tpu_custom_call.1} parent=5 // pred_region
        %s270 = ssub.s32 %s13, 1
        %s271 = smul.u32 16, %s18
        %s272 = ssub.s32 25, %s271
        %p273 = scmp.lt.s32.totalorder %s272, 16
        %s274 = scalar_select %p273, %s272, 16
        %s275 = smul.u32 64, %s274
        %p276 = scmp.lt.s32.totalorder %s271, 24
        %s277 = scalar_select %p276, %s271, 24
        %s278 = smul.addr %s277, 4
        %s279 = scalar_lea.vmem %s0, %s278
        %p280 = pneg %p39
        %p281 = pneg %p36
        %s282 = smul.u32 16, %s18
        %s283 = ssub.s32 25, %s282
        %p284 = scmp.lt.s32.totalorder %s283, 16
        %s285 = scalar_select %p284, %s283, 16
        %s286 = smul.u32 64, %s285
        %p287 = scmp.lt.s32.totalorder %s282, 24
        %s288 = scalar_select %p287, %s282, 24
        %s289 = smul.addr %s288, 4
        %s290 = scalar_lea.vmem %s1, %s289
        %p291 = pneg %p65
        %p292 = pneg %p62
        %p293 = pneg %p86
        %p294 = pneg %p83
        %p295 = pneg %p107
        %p296 = pneg %p104
        %p297 = pneg %p128
        %p298 = pneg %p125
        %p299 = pneg %p149
        %p300 = pneg %p146
        %p301 = pneg %p170
        %p302 = pneg %p167
        %p303 = pneg %p196
        %p304 = pneg %p193
        %s305 = sand.u32 %s183, 1
        %s306 = sand.u32 %s183, 1
        %s307 = smul.addr %s306, 128
        %s308 = scalar_lea.vmem [#allocation2], %s307
        %s309 = smul.u32 16, %s18
        %s310 = ssub.s32 25, %s309
        %p311 = scmp.lt.s32.totalorder %s310, 16
        %s312 = scalar_select %p311, %s310, 16
        %s313 = smul.u32 64, %s312
        %p314 = scmp.lt.s32.totalorder %s309, 24
        %s315 = scalar_select %p314, %s309, 24
        %s316 = smul.addr %s315, 4
        %s317 = scalar_lea.vmem %s0, %s316
        %s318 = smul.u32 16, %s18
        %s319 = ssub.s32 25, %s318
        %p320 = scmp.lt.s32.totalorder %s319, 16
        %s321 = scalar_select %p320, %s319, 16
        %s322 = smul.u32 64, %s321
        %s323 = smul.u32 16, %s18
        %s324 = ssub.s32 25, %s323
        %p325 = scmp.lt.s32.totalorder %s324, 16
        %s326 = scalar_select %p325, %s324, 16
        %s327 = smul.u32 64, %s326
        %p328 = scmp.lt.s32.totalorder %s323, 24
        %s329 = scalar_select %p328, %s323, 24
        %s330 = smul.addr %s329, 4
        %s331 = scalar_lea.vmem %s1, %s330
        %s332 = smul.u32 16, %s18
        %s333 = ssub.s32 25, %s332
        %p334 = scmp.lt.s32.totalorder %s333, 16
        %s335 = scalar_select %p334, %s333, 16
        %s336 = smul.u32 64, %s335
        %s337 = smul.u32 16, %s18
        %s338 = ssub.s32 25, %s337
        %p339 = scmp.lt.s32.totalorder %s338, 16
        %s340 = scalar_select %p339, %s338, 16
        %s341 = smul.u32 128, %s340
        %v343 = vld [vmem:[%s317] sm:$0xf]
        %v344 = vld [vmem:[%s317 + $0x4] sm:$0xf]
        %v345 = vld [vmem:[%s317 + $0x8] sm:$0xf]
        %v346 = vld [vmem:[%s317 + $0xc] sm:$0xf]
        %v347 = vld [vmem:[%s317 + $0x10] sm:$0xf]
        %v348 = vld [vmem:[%s317 + $0x14] sm:$0xf]
        %v349 = vld [vmem:[%s317 + $0x18] sm:$0xf]
        %v350 = vld [vmem:[%s317 + $0x1c] sm:$0xf]
        %v351 = vld [vmem:[%s317 + $0x20] sm:$0xf]
        %v352 = vld [vmem:[%s317 + $0x24] sm:$0xf]
        %v353 = vld [vmem:[%s317 + $0x28] sm:$0xf]
        %v354 = vld [vmem:[%s317 + $0x2c] sm:$0xf]
        %v355 = vld [vmem:[%s317 + $0x30] sm:$0xf]
        %v356 = vld [vmem:[%s317 + $0x34] sm:$0xf]
        %v357 = vld [vmem:[%s317 + $0x38] sm:$0xf]
        %v358 = vld [vmem:[%s317 + $0x3c] sm:$0xf]
        %v359 = vld [vmem:[%s2] sm:$0xf]
        %v360 = vld [vmem:[%s2 + $0x4] sm:$0xf]
        %v361 = vld [vmem:[%s331] sm:$0xf]
        %v362 = vld [vmem:[%s331 + $0x4] sm:$0xf]
        %v363 = vld [vmem:[%s331 + $0x8] sm:$0xf]
        %v364 = vld [vmem:[%s331 + $0xc] sm:$0xf]
        %v365 = vld [vmem:[%s331 + $0x10] sm:$0xf]
        %v366 = vld [vmem:[%s331 + $0x14] sm:$0xf]
        %v367 = vld [vmem:[%s331 + $0x18] sm:$0xf]
        %v368 = vld [vmem:[%s331 + $0x1c] sm:$0xf]
        %v369 = vld [vmem:[%s331 + $0x20] sm:$0xf]
        %v370 = vld [vmem:[%s331 + $0x24] sm:$0xf]
        %v371 = vld [vmem:[%s331 + $0x28] sm:$0xf]
        %v372 = vld [vmem:[%s331 + $0x2c] sm:$0xf]
        %v373 = vld [vmem:[%s331 + $0x30] sm:$0xf]
        %v374 = vld [vmem:[%s331 + $0x34] sm:$0xf]
        %v375 = vld [vmem:[%s331 + $0x38] sm:$0xf]
        %v376 = vld [vmem:[%s331 + $0x3c] sm:$0xf]
        %v377 = vld [vmem:[%s3] sm:$0xf]
        %v378 = vld [vmem:[%s3 + $0x4] sm:$0xf]
        %v395 = vunpack.c.l.b16 %v361
        %v396 = vunpack.c.l.b16 %v362
        %v397 = vunpack.c.l.b16 %v363
        %v398 = vunpack.c.l.b16 %v364
        %v399 = vunpack.c.l.b16 %v365
        %v400 = vunpack.c.l.b16 %v366
        %v401 = vunpack.c.l.b16 %v367
        %v402 = vunpack.c.l.b16 %v368
        %v403 = vunpack.c.l.b16 %v369
        %v404 = vunpack.c.l.b16 %v370
        %v405 = vunpack.c.l.b16 %v371
        %v406 = vunpack.c.l.b16 %v372
        %v407 = vunpack.c.l.b16 %v373
        %v408 = vunpack.c.l.b16 %v374
        %v409 = vunpack.c.l.b16 %v375
        %v410 = vunpack.c.l.b16 %v376
        %v411 = vpack.c.b16 %v396, %v395
        %v412 = vpack.c.b16 %v398, %v397
        %v413 = vpack.c.b16 %v400, %v399
        %v414 = vpack.c.b16 %v402, %v401
        %v415 = vpack.c.b16 %v404, %v403
        %v416 = vpack.c.b16 %v406, %v405
        %v417 = vpack.c.b16 %v408, %v407
        %v418 = vpack.c.b16 %v410, %v409
        %v421 = vunpack.c.l.b16 %v377
        %v422 = vunpack.c.l.b16 %v378
        %v423 = vpack.c.b16 %v422, %v421
        %vm425 = vcmask 130048
        %v427 = vsel %vm425, %v411, 0
        %v430 = vsel %vm425, %v412, 0
        %v433 = vsel %vm425, %v413, 0
        %v436 = vsel %vm425, %v414, 0
        %v439 = vsel %vm425, %v415, 0
        %v442 = vsel %vm425, %v416, 0
        %v445 = vsel %vm425, %v417, 0
        %v448 = vsel %vm425, %v418, 0
        %450 = vmatprep.subr.bf16.mxu0 0
        %451 = vmatpush1.bf16.msra.mxu0 %v423
        %452 = vmatprep.subr.bf16.mxu0 0
        %453 = vmatpush1.bf16.msra.mxu0 0
        %454 = vmatprep.subr.bf16.mxu0 0
        %455 = vmatpush1.bf16.msra.mxu0 0
        %456 = vmatprep.subr.bf16.mxu0 0
        %457 = vmatpush1.bf16.msra.mxu0 0
        %458 = vmatprep.subr.bf16.mxu0 0
        %459 = vmatpush1.bf16.msra.mxu0 0
        %460 = vmatprep.subr.bf16.mxu0 0
        %461 = vmatpush1.bf16.msra.mxu0 0
        %462 = vmatprep.subr.bf16.mxu0 0
        %463 = vmatpush1.bf16.msra.mxu0 0
        %464 = vmatprep.subr.bf16.mxu0 0
        %465 = vmatpush1.bf16.msra.mxu0 0
        %466 = vmatprep.subr.bf16.mxu0 0
        %467 = vmatpush1.bf16.msra.mxu0 0
        %468 = vmatprep.subr.bf16.mxu0 0
        %469 = vmatpush1.bf16.msra.mxu0 0
        %470 = vmatprep.subr.bf16.mxu0 0
        %471 = vmatpush1.bf16.msra.mxu0 0
        %472 = vmatprep.subr.bf16.mxu0 0
        %473 = vmatpush1.bf16.msra.mxu0 0
        %474 = vmatprep.subr.bf16.mxu0 0
        %475 = vmatpush1.bf16.msra.mxu0 0
        %476 = vmatprep.subr.bf16.mxu0 0
        %477 = vmatpush1.bf16.msra.mxu0 0
        %478 = vmatprep.subr.bf16.mxu0 0
        %479 = vmatpush1.bf16.msra.mxu0 0
        %480 = vmatprep.subr.bf16.mxu0 0
        %481 = vmatpush1.bf16.msra.mxu0 0
        %482 = vmatprep.mubr.bf16.mxu0 0
        %483 = vmatmul.mubr.bf16.gmra.mrb[0].mxu0 %v427
        %v484 = vpop.f32.mrb[0].mxu0
        %v485 = vadd.f32 0.0, %v484
        %v486 = vpop.f32.mrb[0].mxu0
        %v487 = vpop.f32.mrb[0].mxu0
        %v488 = vadd.f32 0.0, %v487
        %v489 = vpop.f32.mrb[0].mxu0
        %490 = vmatprep.mubr.bf16.mxu0 0
        %491 = vmatmul.mubr.bf16.gmra.mrb[0].mxu0 %v430
        %v492 = vpop.f32.mrb[0].mxu0
        %v493 = vadd.f32 0.0, %v492
        %v494 = vpop.f32.mrb[0].mxu0
        %v495 = vpop.f32.mrb[0].mxu0
        %v496 = vadd.f32 0.0, %v495
        %v497 = vpop.f32.mrb[0].mxu0
        %498 = vmatprep.mubr.bf16.mxu0 0
        %499 = vmatmul.mubr.bf16.gmra.mrb[0].mxu0 %v433
        %v500 = vpop.f32.mrb[0].mxu0
        %v501 = vadd.f32 0.0, %v500
        %v502 = vpop.f32.mrb[0].mxu0
        %v503 = vpop.f32.mrb[0].mxu0
        %v504 = vadd.f32 0.0, %v503
        %v505 = vpop.f32.mrb[0].mxu0
        %506 = vmatprep.mubr.bf16.mxu0 0
        %507 = vmatmul.mubr.bf16.gmra.mrb[0].mxu0 %v436
        %v508 = vpop.f32.mrb[0].mxu0
        %v509 = vadd.f32 0.0, %v508
        %v510 = vpop.f32.mrb[0].mxu0
        %v511 = vpop.f32.mrb[0].mxu0
        %v512 = vadd.f32 0.0, %v511
        %v513 = vpop.f32.mrb[0].mxu0
        %514 = vmatprep.mubr.bf16.mxu0 0
        %515 = vmatmul.mubr.bf16.gmra.mrb[0].mxu0 %v439
        %v516 = vpop.f32.mrb[0].mxu0
        %v517 = vadd.f32 0.0, %v516
        %v518 = vpop.f32.mrb[0].mxu0
        %v519 = vpop.f32.mrb[0].mxu0
        %v520 = vadd.f32 0.0, %v519
        %v521 = vpop.f32.mrb[0].mxu0
        %522 = vmatprep.mubr.bf16.mxu0 0
        %523 = vmatmul.mubr.bf16.gmra.mrb[0].mxu0 %v442
        %v524 = vpop.f32.mrb[0].mxu0
        %v525 = vadd.f32 0.0, %v524
        %v526 = vpop.f32.mrb[0].mxu0
        %v527 = vpop.f32.mrb[0].mxu0
        %v528 = vadd.f32 0.0, %v527
        %v529 = vpop.f32.mrb[0].mxu0
        %530 = vmatprep.mubr.bf16.mxu0 0
        %531 = vmatmul.mubr.bf16.gmra.mrb[0].mxu0 %v445
        %v532 = vpop.f32.mrb[0].mxu0
        %v533 = vadd.f32 0.0, %v532
        %v534 = vpop.f32.mrb[0].mxu0
        %v535 = vpop.f32.mrb[0].mxu0
        %v536 = vadd.f32 0.0, %v535
        %v537 = vpop.f32.mrb[0].mxu0
        %538 = vmatprep.mubr.bf16.mxu0 0
        %539 = vmatmul.mubr.bf16.gmra.mrb[0].mxu0 %v448
        %v540 = vpop.f32.mrb[0].mxu0
        %v541 = vadd.f32 0.0, %v540
        %v542 = vpop.f32.mrb[0].mxu0
        %v543 = vpop.f32.mrb[0].mxu0
        %v544 = vadd.f32 0.0, %v543
        %v545 = vpop.f32.mrb[0].mxu0
        %546 = vdwg.mxu0
        %v563 = vunpack.c.l.b16 %v343
        %v564 = vunpack.c.l.b16 %v344
        %v565 = vunpack.c.l.b16 %v345
        %v566 = vunpack.c.l.b16 %v346
        %v567 = vunpack.c.l.b16 %v347
        %v568 = vunpack.c.l.b16 %v348
        %v569 = vunpack.c.l.b16 %v349
        %v570 = vunpack.c.l.b16 %v350
        %v571 = vunpack.c.l.b16 %v351
        %v572 = vunpack.c.l.b16 %v352
        %v573 = vunpack.c.l.b16 %v353
        %v574 = vunpack.c.l.b16 %v354
        %v575 = vunpack.c.l.b16 %v355
        %v576 = vunpack.c.l.b16 %v356
        %v577 = vunpack.c.l.b16 %v357
        %v578 = vunpack.c.l.b16 %v358
        %v579 = vpack.c.b16 %v564, %v563
        %v580 = vpack.c.b16 %v566, %v565
        %v581 = vpack.c.b16 %v568, %v567
        %v582 = vpack.c.b16 %v570, %v569
        %v583 = vpack.c.b16 %v572, %v571
        %v584 = vpack.c.b16 %v574, %v573
        %v585 = vpack.c.b16 %v576, %v575
        %v586 = vpack.c.b16 %v578, %v577
        %v589 = vunpack.c.l.b16 %v359
        %v590 = vunpack.c.l.b16 %v360
        %v591 = vpack.c.b16 %v590, %v589
        %v594 = vsel %vm425, %v579, 0
        %v597 = vsel %vm425, %v580, 0
        %v600 = vsel %vm425, %v581, 0
        %v603 = vsel %vm425, %v582, 0
        %v606 = vsel %vm425, %v583, 0
        %v609 = vsel %vm425, %v584, 0
        %v612 = vsel %vm425, %v585, 0
        %v615 = vsel %vm425, %v586, 0
        %617 = vmatprep.subr.bf16.mxu0 0
        %618 = vmatpush1.bf16.msra.mxu0 %v591
        %619 = vmatprep.subr.bf16.mxu0 0
        %620 = vmatpush1.bf16.msra.mxu0 0
        %621 = vmatprep.subr.bf16.mxu0 0
        %622 = vmatpush1.bf16.msra.mxu0 0
        %623 = vmatprep.subr.bf16.mxu0 0
        %624 = vmatpush1.bf16.msra.mxu0 0
        %625 = vmatprep.subr.bf16.mxu0 0
        %626 = vmatpush1.bf16.msra.mxu0 0
        %627 = vmatprep.subr.bf16.mxu0 0
        %628 = vmatpush1.bf16.msra.mxu0 0
        %629 = vmatprep.subr.bf16.mxu0 0
        %630 = vmatpush1.bf16.msra.mxu0 0
        %631 = vmatprep.subr.bf16.mxu0 0
        %632 = vmatpush1.bf16.msra.mxu0 0
        %633 = vmatprep.subr.bf16.mxu0 0
        %634 = vmatpush1.bf16.msra.mxu0 0
        %635 = vmatprep.subr.bf16.mxu0 0
        %636 = vmatpush1.bf16.msra.mxu0 0
        %637 = vmatprep.subr.bf16.mxu0 0
        %638 = vmatpush1.bf16.msra.mxu0 0
        %639 = vmatprep.subr.bf16.mxu0 0
        %640 = vmatpush1.bf16.msra.mxu0 0
        %641 = vmatprep.subr.bf16.mxu0 0
        %642 = vmatpush1.bf16.msra.mxu0 0
        %643 = vmatprep.subr.bf16.mxu0 0
        %644 = vmatpush1.bf16.msra.mxu0 0
        %645 = vmatprep.subr.bf16.mxu0 0
        %646 = vmatpush1.bf16.msra.mxu0 0
        %647 = vmatprep.subr.bf16.mxu0 0
        %648 = vmatpush1.bf16.msra.mxu0 0
        %649 = vmatprep.mubr.bf16.mxu0 0
        %650 = vmatmul.mubr.bf16.gmra.mrb[0].mxu0 %v594
        %v651 = vpop.f32.mrb[0].mxu0
        %v652 = vadd.f32 %v485, %v651
        %v653 = vpop.f32.mrb[0].mxu0
        %v654 = vpop.f32.mrb[0].mxu0
        %v655 = vadd.f32 %v488, %v654
        %v656 = vpop.f32.mrb[0].mxu0
        %657 = vmatprep.mubr.bf16.mxu0 0
        %658 = vmatmul.mubr.bf16.gmra.mrb[0].mxu0 %v597
        %v659 = vpop.f32.mrb[0].mxu0
        %v660 = vadd.f32 %v493, %v659
        %v661 = vpop.f32.mrb[0].mxu0
        %v662 = vpop.f32.mrb[0].mxu0
        %v663 = vadd.f32 %v496, %v662
        %v664 = vpop.f32.mrb[0].mxu0
        %665 = vmatprep.mubr.bf16.mxu0 0
        %666 = vmatmul.mubr.bf16.gmra.mrb[0].mxu0 %v600
        %v667 = vpop.f32.mrb[0].mxu0
        %v668 = vadd.f32 %v501, %v667
        %v669 = vpop.f32.mrb[0].mxu0
        %v670 = vpop.f32.mrb[0].mxu0
        %v671 = vadd.f32 %v504, %v670
        %v672 = vpop.f32.mrb[0].mxu0
        %673 = vmatprep.mubr.bf16.mxu0 0
        %674 = vmatmul.mubr.bf16.gmra.mrb[0].mxu0 %v603
        %v675 = vpop.f32.mrb[0].mxu0
        %v676 = vadd.f32 %v509, %v675
        %v677 = vpop.f32.mrb[0].mxu0
        %v678 = vpop.f32.mrb[0].mxu0
        %v679 = vadd.f32 %v512, %v678
        %v680 = vpop.f32.mrb[0].mxu0
        %681 = vmatprep.mubr.bf16.mxu0 0
        %682 = vmatmul.mubr.bf16.gmra.mrb[0].mxu0 %v606
        %v683 = vpop.f32.mrb[0].mxu0
        %v684 = vadd.f32 %v517, %v683
        %v685 = vpop.f32.mrb[0].mxu0
        %v686 = vpop.f32.mrb[0].mxu0
        %v687 = vadd.f32 %v520, %v686
        %v688 = vpop.f32.mrb[0].mxu0
        %689 = vmatprep.mubr.bf16.mxu0 0
        %690 = vmatmul.mubr.bf16.gmra.mrb[0].mxu0 %v609
        %v691 = vpop.f32.mrb[0].mxu0
        %v692 = vadd.f32 %v525, %v691
        %v693 = vpop.f32.mrb[0].mxu0
        %v694 = vpop.f32.mrb[0].mxu0
        %v695 = vadd.f32 %v528, %v694
        %v696 = vpop.f32.mrb[0].mxu0
        %697 = vmatprep.mubr.bf16.mxu0 0
        %698 = vmatmul.mubr.bf16.gmra.mrb[0].mxu0 %v612
        %v699 = vpop.f32.mrb[0].mxu0
        %v700 = vadd.f32 %v533, %v699
        %v701 = vpop.f32.mrb[0].mxu0
        %v702 = vpop.f32.mrb[0].mxu0
        %v703 = vadd.f32 %v536, %v702
        %v704 = vpop.f32.mrb[0].mxu0
        %705 = vmatprep.mubr.bf16.mxu0 0
        %706 = vmatmul.mubr.bf16.gmra.mrb[0].mxu0 %v615
        %v707 = vpop.f32.mrb[0].mxu0
        %v708 = vadd.f32 %v541, %v707
        %v709 = vpop.f32.mrb[0].mxu0
        %v710 = vpop.f32.mrb[0].mxu0
        %v711 = vadd.f32 %v544, %v710
        %v712 = vpop.f32.mrb[0].mxu0
        %713 = vdwg.mxu0
        %v714 = vld [vmem:[%s4] sm:$0x1]
        %v716 = vlaneseq
        %v717 = vshrl.u32 %v716, 7
        %v718 = vsub.s32 0, %v717
        %v719 = vrot.slane %v714, %v718
        %v721 = vadd.f32 %v652, %v719
        %v722 = vadd.f32 %v655, %v719
        %v723 = vadd.f32 %v660, %v719
        %v724 = vadd.f32 %v663, %v719
        %v725 = vadd.f32 %v668, %v719
        %v726 = vadd.f32 %v671, %v719
        %v727 = vadd.f32 %v676, %v719
        %v728 = vadd.f32 %v679, %v719
        %v729 = vadd.f32 %v684, %v719
        %v730 = vadd.f32 %v687, %v719
        %v731 = vadd.f32 %v692, %v719
        %v732 = vadd.f32 %v695, %v719
        %v733 = vadd.f32 %v700, %v719
        %v734 = vadd.f32 %v703, %v719
        %v735 = vadd.f32 %v708, %v719
        %v736 = vadd.f32 %v711, %v719
        %v737 = vmax.f32 %v721, 0.0
        %v738 = vmax.f32 %v722, 0.0
        %v739 = vmax.f32 %v723, 0.0
        %v740 = vmax.f32 %v724, 0.0
        %v741 = vmax.f32 %v725, 0.0
        %v742 = vmax.f32 %v726, 0.0
        %v743 = vmax.f32 %v727, 0.0
        %v744 = vmax.f32 %v728, 0.0
        %v745 = vmax.f32 %v729, 0.0
        %v746 = vmax.f32 %v730, 0.0
        %v747 = vmax.f32 %v731, 0.0
        %v748 = vmax.f32 %v732, 0.0
        %v749 = vmax.f32 %v733, 0.0
        %v750 = vmax.f32 %v734, 0.0
        %v751 = vmax.f32 %v735, 0.0
        %v752 = vmax.f32 %v736, 0.0
        %v753 = vpack.c.bf16 %v738, %v737
        %v754 = vpack.c.bf16 %v740, %v739
        %v755 = vpack.c.bf16 %v742, %v741
        %v756 = vpack.c.bf16 %v744, %v743
        %v757 = vpack.c.bf16 %v746, %v745
        %v758 = vpack.c.bf16 %v748, %v747
        %v759 = vpack.c.bf16 %v750, %v749
        %v760 = vpack.c.bf16 %v752, %v751
        %v761 = vld [vmem:[%s5] sm:$0xf]
        %v762 = vld [vmem:[%s5 + $0x4] sm:$0xf]
        %v763 = vld [vmem:[%s5 + $0x8] sm:$0xf]
        %v764 = vld [vmem:[%s5 + $0xc] sm:$0xf]
        %v765 = vld [vmem:[%s5 + $0x10] sm:$0xf]
        %v766 = vld [vmem:[%s5 + $0x14] sm:$0xf]
        %v767 = vld [vmem:[%s5 + $0x18] sm:$0xf]
        %v768 = vld [vmem:[%s5 + $0x1c] sm:$0xf]
        %v769 = vld [vmem:[%s5 + $0x20] sm:$0xf]
        %v770 = vld [vmem:[%s5 + $0x24] sm:$0xf]
        %v771 = vld [vmem:[%s5 + $0x28] sm:$0xf]
        %v772 = vld [vmem:[%s5 + $0x2c] sm:$0xf]
        %v773 = vld [vmem:[%s5 + $0x30] sm:$0xf]
        %v774 = vld [vmem:[%s5 + $0x34] sm:$0xf]
        %v775 = vld [vmem:[%s5 + $0x38] sm:$0xf]
        %v776 = vld [vmem:[%s5 + $0x3c] sm:$0xf]
        %v777 = vld [vmem:[%s6] sm:$0x1]
        %v779 = vlaneseq
        %v780 = vshrl.u32 %v779, 7
        %v781 = vsub.s32 0, %v780
        %v782 = vrot.slane %v777, %v781
        %v800 = vunpack.c.l.b16 %v761
        %v801 = vunpack.c.l.b16 %v762
        %v802 = vunpack.c.l.b16 %v763
        %v803 = vunpack.c.l.b16 %v764
        %v804 = vunpack.c.l.b16 %v765
        %v805 = vunpack.c.l.b16 %v766
        %v806 = vunpack.c.l.b16 %v767
        %v807 = vunpack.c.l.b16 %v768
        %v808 = vunpack.c.l.b16 %v769
        %v809 = vunpack.c.l.b16 %v770
        %v810 = vunpack.c.l.b16 %v771
        %v811 = vunpack.c.l.b16 %v772
        %v812 = vunpack.c.l.b16 %v773
        %v813 = vunpack.c.l.b16 %v774
        %v814 = vunpack.c.l.b16 %v775
        %v815 = vunpack.c.l.b16 %v776
        %v816 = vpack.c.b16 %v801, %v800
        %v817 = vpack.c.b16 %v803, %v802
        %v818 = vpack.c.b16 %v805, %v804
        %v819 = vpack.c.b16 %v807, %v806
        %v820 = vpack.c.b16 %v809, %v808
        %v821 = vpack.c.b16 %v811, %v810
        %v822 = vpack.c.b16 %v813, %v812
        %v823 = vpack.c.b16 %v815, %v814
        %832 = vmatprep.subr.bf16.mxu0 0
        %833 = vmatpush1.bf16.msra.mxu0 %v816
        %834 = vmatprep.subr.bf16.mxu0 0
        %835 = vmatpush1.bf16.msra.mxu0 %v817
        %836 = vmatprep.subr.bf16.mxu0 0
        %837 = vmatpush1.bf16.msra.mxu0 %v818
        %838 = vmatprep.subr.bf16.mxu0 0
        %839 = vmatpush1.bf16.msra.mxu0 %v819
        %840 = vmatprep.subr.bf16.mxu0 0
        %841 = vmatpush1.bf16.msra.mxu0 %v820
        %842 = vmatprep.subr.bf16.mxu0 0
        %843 = vmatpush1.bf16.msra.mxu0 %v821
        %844 = vmatprep.subr.bf16.mxu0 0
        %845 = vmatpush1.bf16.msra.mxu0 %v822
        %846 = vmatprep.subr.bf16.mxu0 0
        %847 = vmatpush1.bf16.msra.mxu0 %v823
        %848 = vmatprep.subr.bf16.mxu0 0
        %849 = vmatpush1.bf16.msra.mxu0 0
        %850 = vmatprep.subr.bf16.mxu0 0
        %851 = vmatpush1.bf16.msra.mxu0 0
        %852 = vmatprep.subr.bf16.mxu0 0
        %853 = vmatpush1.bf16.msra.mxu0 0
        %854 = vmatprep.subr.bf16.mxu0 0
        %855 = vmatpush1.bf16.msra.mxu0 0
        %856 = vmatprep.subr.bf16.mxu0 0
        %857 = vmatpush1.bf16.msra.mxu0 0
        %858 = vmatprep.subr.bf16.mxu0 0
        %859 = vmatpush1.bf16.msra.mxu0 0
        %860 = vmatprep.subr.bf16.mxu0 0
        %861 = vmatpush1.bf16.msra.mxu0 0
        %862 = vmatprep.subr.bf16.mxu0 0
        %863 = vmatpush1.bf16.msra.mxu0 0
        %864 = vmatprep.mubr.bf16.mxu0 0
        %865 = vmatmul.mubr.bf16.gmra.mrb[0].mxu0 %v753
        %v866 = vpop.f32.mrb[0].mxu0
        %v867 = vadd.f32 %v782, %v866
        %v868 = vpop.f32.mrb[0].mxu0
        %v869 = vpop.f32.mrb[0].mxu0
        %v870 = vadd.f32 %v782, %v869
        %v871 = vpop.f32.mrb[0].mxu0
        %872 = vmatprep.mubr.bf16.mxu0 0
        %873 = vmatmul.mubr.bf16.gmra.mrb[0].mxu0 %v754
        %v874 = vpop.f32.mrb[0].mxu0
        %v875 = vadd.f32 %v782, %v874
        %v876 = vpop.f32.mrb[0].mxu0
        %v877 = vpop.f32.mrb[0].mxu0
        %v878 = vadd.f32 %v782, %v877
        %v879 = vpop.f32.mrb[0].mxu0
        %880 = vmatprep.mubr.bf16.mxu0 0
        %881 = vmatmul.mubr.bf16.gmra.mrb[0].mxu0 %v755
        %v882 = vpop.f32.mrb[0].mxu0
        %v883 = vadd.f32 %v782, %v882
        %v884 = vpop.f32.mrb[0].mxu0
        %v885 = vpop.f32.mrb[0].mxu0
        %v886 = vadd.f32 %v782, %v885
        %v887 = vpop.f32.mrb[0].mxu0
        %888 = vmatprep.mubr.bf16.mxu0 0
        %889 = vmatmul.mubr.bf16.gmra.mrb[0].mxu0 %v756
        %v890 = vpop.f32.mrb[0].mxu0
        %v891 = vadd.f32 %v782, %v890
        %v892 = vpop.f32.mrb[0].mxu0
        %v893 = vpop.f32.mrb[0].mxu0
        %v894 = vadd.f32 %v782, %v893
        %v895 = vpop.f32.mrb[0].mxu0
        %896 = vmatprep.mubr.bf16.mxu0 0
        %897 = vmatmul.mubr.bf16.gmra.mrb[0].mxu0 %v757
        %v898 = vpop.f32.mrb[0].mxu0
        %v899 = vadd.f32 %v782, %v898
        %v900 = vpop.f32.mrb[0].mxu0
        %v901 = vpop.f32.mrb[0].mxu0
        %v902 = vadd.f32 %v782, %v901
        %v903 = vpop.f32.mrb[0].mxu0
        %904 = vmatprep.mubr.bf16.mxu0 0
        %905 = vmatmul.mubr.bf16.gmra.mrb[0].mxu0 %v758
        %v906 = vpop.f32.mrb[0].mxu0
        %v907 = vadd.f32 %v782, %v906
        %v908 = vpop.f32.mrb[0].mxu0
        %v909 = vpop.f32.mrb[0].mxu0
        %v910 = vadd.f32 %v782, %v909
        %v911 = vpop.f32.mrb[0].mxu0
        %912 = vmatprep.mubr.bf16.mxu0 0
        %913 = vmatmul.mubr.bf16.gmra.mrb[0].mxu0 %v759
        %v914 = vpop.f32.mrb[0].mxu0
        %v915 = vadd.f32 %v782, %v914
        %v916 = vpop.f32.mrb[0].mxu0
        %v917 = vpop.f32.mrb[0].mxu0
        %v918 = vadd.f32 %v782, %v917
        %v919 = vpop.f32.mrb[0].mxu0
        %920 = vmatprep.mubr.bf16.mxu0 0
        %921 = vmatmul.mubr.bf16.gmra.mrb[0].mxu0 %v760
        %v922 = vpop.f32.mrb[0].mxu0
        %v923 = vadd.f32 %v782, %v922
        %v924 = vpop.f32.mrb[0].mxu0
        %v925 = vpop.f32.mrb[0].mxu0
        %v926 = vadd.f32 %v782, %v925
        %v927 = vpop.f32.mrb[0].mxu0
        %928 = vdwg.mxu0
        %vm929 = vcmask 64512
        %930 = vst.msk [vmem:[%s308] sm:$0xff] %vm929, %v867
        %931 = vst.msk [vmem:[%s308 + $0x8] sm:$0xff] %vm929, %v870
        %932 = vst.msk [vmem:[%s308 + $0x10] sm:$0xff] %vm929, %v875
        %933 = vst.msk [vmem:[%s308 + $0x18] sm:$0xff] %vm929, %v878
        %934 = vst.msk [vmem:[%s308 + $0x20] sm:$0xff] %vm929, %v883
        %935 = vst.msk [vmem:[%s308 + $0x28] sm:$0xff] %vm929, %v886
        %936 = vst.msk [vmem:[%s308 + $0x30] sm:$0xff] %vm929, %v891
        %937 = vst.msk [vmem:[%s308 + $0x38] sm:$0xff] %vm929, %v894
        %938 = vst.msk [vmem:[%s308 + $0x40] sm:$0xff] %vm929, %v899
        %939 = vst.msk [vmem:[%s308 + $0x48] sm:$0xff] %vm929, %v902
        %940 = vst.msk [vmem:[%s308 + $0x50] sm:$0xff] %vm929, %v907
        %941 = vst.msk [vmem:[%s308 + $0x58] sm:$0xff] %vm929, %v910
        %942 = vst.msk [vmem:[%s308 + $0x60] sm:$0xff] %vm929, %v915
        %943 = vst.msk [vmem:[%s308 + $0x68] sm:$0xff] %vm929, %v918
        %944 = vst.msk [vmem:[%s308 + $0x70] sm:$0xff] %vm929, %v923
        %945 = vst.msk [vmem:[%s308 + $0x78] sm:$0xff] %vm929, %v926
        %s946 = sand.u32 %s183, 1
        %s947 = sand.u32 %s183, 1
        %s948 = smul.addr %s947, 128
        %s949 = scalar_lea.vmem [#allocation2], %s948
        // Predicated region
        $region49: #{tpu_custom_call.1} parent=47 // pred_check
          %p950 = pneg %p193
        $region50: #{tpu_custom_call.1} parent=47 // pred_check_branch
          %952 = sbr.rel (%p950) target = $region52
        $region51: #{tpu_custom_call.1} parent=47 // pred_region
          %s953 = smul.u32 16, %s18
          %s954 = ssub.s32 25, %s953
          %p955 = scmp.lt.s32.totalorder %s954, 16
          %s956 = scalar_select %p955, %s954, 16
          %s957 = smul.u32 128, %s956
          %p958 = scmp.ne.s32.totalorder 0, %s957
          %s959 = smul.addr %s953, 8
          %s960 = scalar_lea.vmem %s7, %s959
          // Predicated region
          $region53: #{tpu_custom_call.1} parent=51 // pred_check
            %p961 = pneg %p958
          $region54: #{tpu_custom_call.1} parent=51 // pred_check_branch
            %963 = sbr.rel (%p961) target = $region56
          $region55: #{tpu_custom_call.1} parent=51 // pred_region
            // Predicated region
            $region57: #{tpu_custom_call.1} parent=55 // pred_check
              _
            $region58: #{tpu_custom_call.1} parent=55 // pred_check_branch
              %965 = sbr.rel (0) target = $region60
            $region59: #{tpu_custom_call.1} parent=55 // pred_region
              // Predicated region
              $region79: #{tpu_custom_call.1} parent=59 // pred_check
                _
              $region80: #{tpu_custom_call.1} parent=59 // pred_check_branch
                %1044 = sbr.rel (0) target = $region82
              $region81: #{tpu_custom_call.1} parent=59 // pred_region
                %s1045 = sshrl.u32 %s956, 4
                // While loop
                $region83: #{tpu_custom_call.1} parent=81 // loop_pre_header
                  _
                $region84: #{tpu_custom_call.1} parent=81 // loop_header
                  %s1047 = sphi 0, %s1049
                  %p1048 = scmp.ge.s32.totalorder %s1047, %s1045
                  %s1052 = sphi 0, %s1089
                  %s1053 = sphi %s949, %s1092
                  %s1054 = sphi %s960, %s1093
                $region85: #{tpu_custom_call.1} parent=81 // loop_header_branch
                  %1051 = sbr.rel (%p1048) target = $region89
                $region86: #{tpu_custom_call.1} parent=81 // loop_body
                  %v1055 = vld [vmem:[%s1053] sm:$0xff]
                  %1056 = vst [vmem:[%s1054] sm:$0xff] %v1055
                  %v1057 = vld [vmem:[%s1053 + $0x8] sm:$0xff]
                  %1058 = vst [vmem:[%s1054 + $0x8] sm:$0xff] %v1057
                  %v1059 = vld [vmem:[%s1053 + $0x10] sm:$0xff]
                  %1060 = vst [vmem:[%s1054 + $0x10] sm:$0xff] %v1059
                  %v1061 = vld [vmem:[%s1053 + $0x18] sm:$0xff]
                  %1062 = vst [vmem:[%s1054 + $0x18] sm:$0xff] %v1061
                  %v1063 = vld [vmem:[%s1053 + $0x20] sm:$0xff]
                  %1064 = vst [vmem:[%s1054 + $0x20] sm:$0xff] %v1063
                  %v1065 = vld [vmem:[%s1053 + $0x28] sm:$0xff]
                  %1066 = vst [vmem:[%s1054 + $0x28] sm:$0xff] %v1065
                  %v1067 = vld [vmem:[%s1053 + $0x30] sm:$0xff]
                  %1068 = vst [vmem:[%s1054 + $0x30] sm:$0xff] %v1067
                  %v1069 = vld [vmem:[%s1053 + $0x38] sm:$0xff]
                  %1070 = vst [vmem:[%s1054 + $0x38] sm:$0xff] %v1069
                  %v1071 = vld [vmem:[%s1053 + $0x40] sm:$0xff]
                  %1072 = vst [vmem:[%s1054 + $0x40] sm:$0xff] %v1071
                  %v1073 = vld [vmem:[%s1053 + $0x48] sm:$0xff]
                  %1074 = vst [vmem:[%s1054 + $0x48] sm:$0xff] %v1073
                  %v1075 = vld [vmem:[%s1053 + $0x50] sm:$0xff]
                  %1076 = vst [vmem:[%s1054 + $0x50] sm:$0xff] %v1075
                  %v1077 = vld [vmem:[%s1053 + $0x58] sm:$0xff]
                  %1078 = vst [vmem:[%s1054 + $0x58] sm:$0xff] %v1077
                  %v1079 = vld [vmem:[%s1053 + $0x60] sm:$0xff]
                  %1080 = vst [vmem:[%s1054 + $0x60] sm:$0xff] %v1079
                  %v1081 = vld [vmem:[%s1053 + $0x68] sm:$0xff]
                  %1082 = vst [vmem:[%s1054 + $0x68] sm:$0xff] %v1081
                  %v1083 = vld [vmem:[%s1053 + $0x70] sm:$0xff]
                  %1084 = vst [vmem:[%s1054 + $0x70] sm:$0xff] %v1083
                  %v1085 = vld [vmem:[%s1053 + $0x78] sm:$0xff]
                  %1086 = vst [vmem:[%s1054 + $0x78] sm:$0xff] %v1085
                  %s1087 = sadd.s32 1, %s1052
                  %p1088 = scmp.ge.s32.totalorder %s1087, %s1045
                  %s1089 = scalar_select %p1088, 0, %s1087
                  %s1090 = smul.u32 %s1089, 128
                  %s1091 = smul.u32 %s1089, 128
                  %s1092 = scalar_lea.vmem %s949, %s1090 [#allocation2]
                  %s1093 = scalar_lea.vmem %s960, %s1091
                $region87: #{tpu_custom_call.1} parent=81 // loop_footer
                  %s1049 = sadd.s32 %s1047, 1
                $region88: #{tpu_custom_call.1} parent=81 // loop_footer_branch
                  %1046 = sbr.rel target = $region84
                $region89: #{tpu_custom_call.1} parent=81 // loop_exit
                  _
                %s1094 = sshrl.u32 %s956, 4
                %s1095 = sand.u32 %s956, 15
                %s1096 = smul.u32 %s1094, 16
                %s1097 = smul.u32 8, %s1096
                %s1098 = scalar_lea.vmem %s949, %s1097 [#allocation2]
                %s1099 = smul.u32 8, %s1096
                %s1100 = scalar_lea.vmem %s960, %s1099
                // While loop
                $region90: #{tpu_custom_call.1} parent=81 // loop_pre_header
                  _
                $region91: #{tpu_custom_call.1} parent=81 // loop_header
                  %s1102 = sphi 0, %s1104
                  %p1103 = scmp.ge.s32.totalorder %s1102, %s1095
                  %s1107 = sphi 0, %s1114
                  %s1108 = sphi %s1098, %s1117
                  %s1109 = sphi %s1100, %s1118
                $region92: #{tpu_custom_call.1} parent=81 // loop_header_branch
                  %1106 = sbr.rel (%p1103) target = $region96
                $region93: #{tpu_custom_call.1} parent=81 // loop_body
                  %v1110 = vld [vmem:[%s1108] sm:$0xff]
                  %1111 = vst [vmem:[%s1109] sm:$0xff] %v1110
                  %s1112 = sadd.s32 1, %s1107
                  %p1113 = scmp.ge.s32.totalorder %s1112, %s1095
                  %s1114 = scalar_select %p1113, 0, %s1112
                  %s1115 = smul.u32 %s1114, 8
                  %s1116 = smul.u32 %s1114, 8
                  %s1117 = scalar_lea.vmem %s1098, %s1115 [#allocation2]
                  %s1118 = scalar_lea.vmem %s1100, %s1116
                $region94: #{tpu_custom_call.1} parent=81 // loop_footer
                  %s1104 = sadd.s32 %s1102, 1
                $region95: #{tpu_custom_call.1} parent=81 // loop_footer_branch
                  %1101 = sbr.rel target = $region91
                $region96: #{tpu_custom_call.1} parent=81 // loop_exit
                  _
              $region82: #{tpu_custom_call.1} parent=59 // pred_fallthru
                _
              // Predicated region
              $region97: #{tpu_custom_call.1} parent=59 // pred_check
                _
              $region98: #{tpu_custom_call.1} parent=59 // pred_check_branch
                %1120 = sbr.rel target = $region100
              $region99: #{tpu_custom_call.1} parent=59 // pred_region
                _
              $region100: #{tpu_custom_call.1} parent=59 // pred_fallthru
                _
            $region60: #{tpu_custom_call.1} parent=55 // pred_fallthru
              _
            // Predicated region
            $region61: #{tpu_custom_call.1} parent=55 // pred_check
              _
            $region62: #{tpu_custom_call.1} parent=55 // pred_check_branch
              %967 = sbr.rel target = $region64
            $region63: #{tpu_custom_call.1} parent=55 // pred_region
              %s969 = sshrl.u32 %s956, 4
              // While loop
              $region65: #{tpu_custom_call.1} parent=63 // loop_pre_header
                _
              $region66: #{tpu_custom_call.1} parent=63 // loop_header
                %s971 = sphi 0, %s973
                %p972 = scmp.ge.s32.totalorder %s971, %s969
                %s976 = sphi 0, %s1013
                %s977 = sphi %s949, %s1016
                %s978 = sphi %s960, %s1017
              $region67: #{tpu_custom_call.1} parent=63 // loop_header_branch
                %975 = sbr.rel (%p972) target = $region71
              $region68: #{tpu_custom_call.1} parent=63 // loop_body
                %v979 = vld [vmem:[%s977] sm:$0xff]
                %980 = vst [vmem:[%s978] sm:$0xff] %v979
                %v981 = vld [vmem:[%s977 + $0x8] sm:$0xff]
                %982 = vst [vmem:[%s978 + $0x8] sm:$0xff] %v981
                %v983 = vld [vmem:[%s977 + $0x10] sm:$0xff]
                %984 = vst [vmem:[%s978 + $0x10] sm:$0xff] %v983
                %v985 = vld [vmem:[%s977 + $0x18] sm:$0xff]
                %986 = vst [vmem:[%s978 + $0x18] sm:$0xff] %v985
                %v987 = vld [vmem:[%s977 + $0x20] sm:$0xff]
                %988 = vst [vmem:[%s978 + $0x20] sm:$0xff] %v987
                %v989 = vld [vmem:[%s977 + $0x28] sm:$0xff]
                %990 = vst [vmem:[%s978 + $0x28] sm:$0xff] %v989
                %v991 = vld [vmem:[%s977 + $0x30] sm:$0xff]
                %992 = vst [vmem:[%s978 + $0x30] sm:$0xff] %v991
                %v993 = vld [vmem:[%s977 + $0x38] sm:$0xff]
                %994 = vst [vmem:[%s978 + $0x38] sm:$0xff] %v993
                %v995 = vld [vmem:[%s977 + $0x40] sm:$0xff]
                %996 = vst [vmem:[%s978 + $0x40] sm:$0xff] %v995
                %v997 = vld [vmem:[%s977 + $0x48] sm:$0xff]
                %998 = vst [vmem:[%s978 + $0x48] sm:$0xff] %v997
                %v999 = vld [vmem:[%s977 + $0x50] sm:$0xff]
                %1000 = vst [vmem:[%s978 + $0x50] sm:$0xff] %v999
                %v1001 = vld [vmem:[%s977 + $0x58] sm:$0xff]
                %1002 = vst [vmem:[%s978 + $0x58] sm:$0xff] %v1001
                %v1003 = vld [vmem:[%s977 + $0x60] sm:$0xff]
                %1004 = vst [vmem:[%s978 + $0x60] sm:$0xff] %v1003
                %v1005 = vld [vmem:[%s977 + $0x68] sm:$0xff]
                %1006 = vst [vmem:[%s978 + $0x68] sm:$0xff] %v1005
                %v1007 = vld [vmem:[%s977 + $0x70] sm:$0xff]
                %1008 = vst [vmem:[%s978 + $0x70] sm:$0xff] %v1007
                %v1009 = vld [vmem:[%s977 + $0x78] sm:$0xff]
                %1010 = vst [vmem:[%s978 + $0x78] sm:$0xff] %v1009
                %s1011 = sadd.s32 1, %s976
                %p1012 = scmp.ge.s32.totalorder %s1011, %s969
                %s1013 = scalar_select %p1012, 0, %s1011
                %s1014 = smul.u32 %s1013, 128
                %s1015 = smul.u32 %s1013, 128
                %s1016 = scalar_lea.vmem %s949, %s1014 [#allocation2]
                %s1017 = scalar_lea.vmem %s960, %s1015
              $region69: #{tpu_custom_call.1} parent=63 // loop_footer
                %s973 = sadd.s32 %s971, 1
              $region70: #{tpu_custom_call.1} parent=63 // loop_footer_branch
                %970 = sbr.rel target = $region66
              $region71: #{tpu_custom_call.1} parent=63 // loop_exit
                _
              %s1018 = sshrl.u32 %s956, 4
              %s1019 = sand.u32 %s956, 15
              %s1020 = smul.u32 %s1018, 16
              %s1021 = smul.u32 8, %s1020
              %s1022 = scalar_lea.vmem %s949, %s1021 [#allocation2]
              %s1023 = smul.u32 8, %s1020
              %s1024 = scalar_lea.vmem %s960, %s1023
              // While loop
              $region72: #{tpu_custom_call.1} parent=63 // loop_pre_header
                _
              $region73: #{tpu_custom_call.1} parent=63 // loop_header
                %s1026 = sphi 0, %s1028
                %p1027 = scmp.ge.s32.totalorder %s1026, %s1019
                %s1031 = sphi 0, %s1038
                %s1032 = sphi %s1022, %s1041
                %s1033 = sphi %s1024, %s1042
              $region74: #{tpu_custom_call.1} parent=63 // loop_header_branch
                %1030 = sbr.rel (%p1027) target = $region78
              $region75: #{tpu_custom_call.1} parent=63 // loop_body
                %v1034 = vld [vmem:[%s1032] sm:$0xff]
                %1035 = vst [vmem:[%s1033] sm:$0xff] %v1034
                %s1036 = sadd.s32 1, %s1031
                %p1037 = scmp.ge.s32.totalorder %s1036, %s1019
                %s1038 = scalar_select %p1037, 0, %s1036
                %s1039 = smul.u32 %s1038, 8
                %s1040 = smul.u32 %s1038, 8
                %s1041 = scalar_lea.vmem %s1022, %s1039 [#allocation2]
                %s1042 = scalar_lea.vmem %s1024, %s1040
              $region76: #{tpu_custom_call.1} parent=63 // loop_footer
                %s1028 = sadd.s32 %s1026, 1
              $region77: #{tpu_custom_call.1} parent=63 // loop_footer_branch
                %1025 = sbr.rel target = $region73
              $region78: #{tpu_custom_call.1} parent=63 // loop_exit
                _
            $region64: #{tpu_custom_call.1} parent=55 // pred_fallthru
              _
          $region56: #{tpu_custom_call.1} parent=51 // pred_fallthru
            _
          %1121 = vnop
        $region52: #{tpu_custom_call.1} parent=47 // pred_fallthru
          _
      $region48: #{tpu_custom_call.1} parent=5 // pred_fallthru
        _
      %p1122 = scmp.le.s32.totalorder 2, %s13
      // Predicated region
      $region101: #{tpu_custom_call.1} parent=5 // pred_check
        %p1123 = pneg %p1122
      $region102: #{tpu_custom_call.1} parent=5 // pred_check_branch
        %1125 = sbr.rel (%p1123) target = $region104
      $region103: #{tpu_custom_call.1} parent=5 // pred_region
        %s1126 = ssub.s32 %s13, 2
        // Predicated region
        $region105: #{tpu_custom_call.1} parent=103 // pred_check
          %p1127 = pneg %p199
        $region106: #{tpu_custom_call.1} parent=103 // pred_check_branch
          %1129 = sbr.rel (%p1127) target = $region108
        $region107: #{tpu_custom_call.1} parent=103 // pred_region
          %s1130 = sand.u32 %s184, 1
          %s1131 = sand.u32 %s184, 1
          %s1132 = smul.addr %s1131, 128
          %s1133 = scalar_lea.vmem [#allocation2], %s1132
        $region108: #{tpu_custom_call.1} parent=103 // pred_fallthru
          _
      $region104: #{tpu_custom_call.1} parent=5 // pred_fallthru
        _
    $region6: #{tpu_custom_call.1} parent=1 // loop_footer
      %s17 = sadd.s32 1, %s13
    $region7: #{tpu_custom_call.1} parent=1 // loop_footer_branch
      %12 = sbr.rel target = $region3
    $region8: #{tpu_custom_call.1} parent=1 // loop_exit
      _

</llo_original>
